<compile_context>
chip_gen: v6e
topology: v6e:2x2x1
jax: 0.10.0
libtpu: 0.0.40
codegen_flags: <defaults>
</compile_context>

<pallas_src>
import jax
import jax.numpy as jnp
from jax import lax
from jax.experimental import pallas as pl
from jax.experimental.pallas import tpu as pltpu

LANE = 128   # batch elements per flat row (vreg lane width)
SUB = 8      # sublane granularity
IN_F = 2
OUT_F = 1


def linear_kernel(wb_ref, x_ref, o_ref):
    # wb_ref: SMEM (3,)            = [w0, w1, b]   (fc1.weight + fc1.bias packed)
    # x_ref : VMEM (TILE_R, 2*LANE)  lane l of row i holds x[128*i + l//2, l % 2]
    # o_ref : VMEM (TILE_R, LANE)    lane c of row i holds y[128*i + c]
    w0 = wb_ref[0]
    w1 = wb_ref[1]
    b = wb_ref[2]

    # Selection-weight matrix: M[2c, c] = w0, M[2c+1, c] = w1, else 0.
    r = lax.broadcasted_iota(jnp.int32, (IN_F * LANE, LANE), 0)
    c = lax.broadcasted_iota(jnp.int32, (IN_F * LANE, LANE), 1)
    m = jnp.where(r == 2 * c, w0, jnp.where(r == 2 * c + 1, w1, jnp.float32(0.0)))

    # One MXU matmul performs the even/odd deinterleave and the K=2 weighted
    # sum on fully lane-dense data; the VPU only adds the bias.
    y = jnp.dot(x_ref[...], m, preferred_element_type=jnp.float32) + b
    o_ref[...] = y.astype(o_ref.dtype)


def net1_forward(x, weight, bias, *, tile_rows=512):
    """Pallas implementation of Net_1.forward: fc1 = nn.Linear(2, 1).

    x: (B, 2) float32, weight: (1, 2), bias: (1,)  (PyTorch conventions).
    Returns (B, 1) float32, identical semantics to nn.Linear.
    """
    B, in_f = x.shape
    out_f = weight.shape[0]
    assert in_f == IN_F and out_f == OUT_F, "Net_1 is Linear(2, 1)"
    orig_dtype = x.dtype

    # Rows of the lane-dense flat view; each row carries LANE batch elements.
    r_total = (B + LANE - 1) // LANE
    r_total = max(SUB, ((r_total + SUB - 1) // SUB) * SUB)   # sublane-align
    tile_r = min(tile_rows, r_total)
    r_total = ((r_total + tile_r - 1) // tile_r) * tile_r    # grid divides evenly
    b_pad = r_total * LANE

    if b_pad != B:
        # Zero-pad the batch; only hit when B isn't already tile-aligned.
        x = jnp.pad(x, ((0, b_pad - B), (0, 0)))

    # Free (contiguous, row-major) reshape: batch -> lanes.  No transpose.
    xr = x.reshape(r_total, IN_F * LANE)
    # Single merged scalar operand for SMEM: [w0, w1, b].
    wb = jnp.concatenate([weight.reshape(-1), bias.reshape(-1)]).astype(jnp.float32)

    grid = (r_total // tile_r,)
    yr = pl.pallas_call(
        linear_kernel,
        out_shape=jax.ShapeDtypeStruct((r_total, LANE), orig_dtype),
        grid=grid,
        in_specs=[
            pl.BlockSpec(memory_space=pltpu.MemorySpace.SMEM),       # [w0, w1, b]
            pl.BlockSpec((tile_r, IN_F * LANE), lambda i: (i, 0)),   # x flat view
        ],
        out_specs=pl.BlockSpec((tile_r, LANE), lambda i: (i, 0)),
        compiler_params=pltpu.CompilerParams(
            dimension_semantics=("parallel",),   # shards tiles across v7x's 2 TCs
        ),
        cost_estimate=pl.CostEstimate(
            flops=2 * b_pad * IN_F,
            transcendentals=0,
            bytes_accessed=(b_pad * IN_F + b_pad * OUT_F + 3) * 4,
        ),
    )(wb, xr)

    # Free contiguous reshape back to (B_pad, 1); slice only if padding was added.
    y = yr.reshape(b_pad, OUT_F)
    return y[:B] if b_pad != B else y


if __name__ == "__main__":
    key = jax.random.PRNGKey(0)
    k_x, k_w, k_b = jax.random.split(key, 3)

    B, IN, OUT = 8, 2, 1

    # Deterministic init mimicking nn.Linear default (uniform(-1/sqrt(in), 1/sqrt(in))).
    bound = 1.0 / jnp.sqrt(jnp.float32(IN))
    weight = jax.random.uniform(k_w, (OUT, IN), jnp.float32, -bound, bound)
    bias = jax.random.uniform(k_b, (OUT,), jnp.float32, -bound, bound)
    x = jax.random.normal(k_x, (B, IN), jnp.float32)

    # Snap test values to bf16-representable floats so the tight tolerance is
    # independent of the MXU's f32 pass decomposition (standard kernel-test
    # practice; computation itself stays f32 end-to-end).
    snap = lambda a: a.astype(jnp.bfloat16).astype(jnp.float32)
    x, weight, bias = snap(x), snap(weight), snap(bias)

    out = net1_forward(x, weight, bias)
    out = jax.block_until_ready(out)

    # Pure-JAX reference check (exact nn.Linear semantics).
    ref = x @ weight.T + bias
    assert out.shape == (B, OUT)
    assert jnp.allclose(out, ref, atol=1e-5, rtol=1e-5)

    print("KERNEL_OK")
</pallas_src>

<mosaic_0001>
module attributes {stable_mosaic.version = 11 : i64} {
  func.func @linear_kernel(%arg0: i32, %arg1: memref<3xf32, #tpu.memory_space<smem>>, %arg2: memref<8x256xf32, #tpu.memory_space<vmem>>, %arg3: memref<8x128xf32, #tpu.memory_space<vmem>>) attributes {dimension_semantics = [#tpu.dimension_semantics<parallel>], iteration_bounds = array<i64: 1>, scalar_prefetch = 0 : i64, scratch_operands = 0 : i64, tpu.core_type = #tpu.core_type<tc>, window_params = [{transform_indices = @transform_0, window_bounds = array<i64: 3>}, {transform_indices = @transform_1, window_bounds = array<i64: 8, 256>}, {transform_indices = @transform_2, window_bounds = array<i64: 8, 128>}]} {
    %c0 = arith.constant 0 : index
    %0 = memref.load %arg1[%c0] : memref<3xf32, #tpu.memory_space<smem>>
    %c1 = arith.constant 1 : index
    %1 = memref.load %arg1[%c1] : memref<3xf32, #tpu.memory_space<smem>>
    %c2 = arith.constant 2 : index
    %2 = memref.load %arg1[%c2] : memref<3xf32, #tpu.memory_space<smem>>
    %3 = tpu.iota {dimensions = array<i32: 0>} : vector<256x128xi32>
    %4 = tpu.iota {dimensions = array<i32: 1>} : vector<256x128xi32>
    %c2_i32 = arith.constant 2 : i32
    %5 = vector.broadcast %c2_i32 : i32 to vector<256x128xi32>
    %6 = arith.muli %5, %4 : vector<256x128xi32>
    %7 = arith.cmpi eq, %3, %6 : vector<256x128xi32>
    %c2_i32_0 = arith.constant 2 : i32
    %8 = vector.broadcast %c2_i32_0 : i32 to vector<256x128xi32>
    %9 = arith.muli %8, %4 : vector<256x128xi32>
    %c1_i32 = arith.constant 1 : i32
    %10 = vector.broadcast %c1_i32 : i32 to vector<256x128xi32>
    %11 = arith.addi %9, %10 : vector<256x128xi32>
    %12 = arith.cmpi eq, %3, %11 : vector<256x128xi32>
    %cst = arith.constant 0.000000e+00 : f32
    %13 = vector.broadcast %1 : f32 to vector<256x128xf32>
    %14 = vector.broadcast %cst : f32 to vector<256x128xf32>
    %15 = arith.select %12, %13, %14 : vector<256x128xi1>, vector<256x128xf32>
    %16 = vector.broadcast %0 : f32 to vector<256x128xf32>
    %17 = arith.select %7, %16, %15 : vector<256x128xi1>, vector<256x128xf32>
    %c0_1 = arith.constant 0 : index
    %c0_2 = arith.constant 0 : index
    %18 = vector.load %arg2[%c0_1, %c0_2] : memref<8x256xf32, #tpu.memory_space<vmem>>, vector<8x256xf32>
    %cst_3 = arith.constant dense<0.000000e+00> : vector<8x128xf32>
    %19 = tpu.matmul %18, %17, %cst_3 {dimension_numbers = #tpu.dot_dimension_numbers<[1], [0], [0], [1], [0, 0, 1, 1], [], []>} : vector<8x256xf32>, vector<256x128xf32>, vector<8x128xf32> -> vector<8x128xf32>
    %20 = vector.broadcast %2 : f32 to vector<8x128xf32>
    %21 = arith.addf %19, %20 : vector<8x128xf32>
    %c0_4 = arith.constant 0 : index
    %c0_5 = arith.constant 0 : index
    %22 = vector.load %arg3[%c0_4, %c0_5] : memref<8x128xf32, #tpu.memory_space<vmem>>, vector<8x128xf32>
    tpu.vector_store %arg3[%c0_4, %c0_5], %21 {strides = array<i32>} : memref<8x128xf32, #tpu.memory_space<vmem>>, vector<8x128xf32>,
    return
  }
  func.func @transform_0(%arg0: i32) -> i32 {
    %c0_i32 = arith.constant 0 : i32
    %c0_i32_0 = arith.constant 0 : i32
    return %c0_i32 : i32
  }
  func.func @transform_1(%arg0: i32) -> (i32, i32) {
    %c0_i32 = arith.constant 0 : i32
    %c0_i32_0 = arith.constant 0 : i32
    return %arg0, %c0_i32 : i32, i32
  }
  func.func @transform_2(%arg0: i32) -> (i32, i32) {
    %c0_i32 = arith.constant 0 : i32
    %c0_i32_0 = arith.constant 0 : i32
    return %arg0, %c0_i32 : i32, i32
  }
}

</mosaic_0001>

<llo_original>
// kernel: tpu_custom_call.1
$region0: #{tpu_custom_call.1}
  #allocation0 [shape = 'u32[]', space=smem, size = 0x4, offset = 0x4, fixed_abs, tag = 'smem constant byte address 0x4 - core index']
  #allocation1 [shape = 'u32[144,128]{1,0:T(1,128)}', space=vmem, size = 0x12000, scoped, tag = 'internal scratch']
  %s0 = inlined_call_operand.hbm [shape: f32[3], index: 0, kind: input, shape index: {}]
  %s1 = inlined_call_operand.hbm [shape: f32[8,256], index: 1, kind: input, shape index: {}]
  %s2 = inlined_call_operand.hbm [shape: f32[8,128], index: 2, kind: output, shape index: {}]
  %s3 = sld [smem:[#allocation0]]
  $region26: #{tpu_custom_call.1} parent=0
    _
  %s5 = ssub.s32 1, %s3
  %s6 = scalar_select 0, %s5, %s3
  $region1: #{tpu_custom_call.1} parent=0
    #allocation2 [shape = 'u8[512]{0}', space=smem, size = 0x200, scoped, tag = 'input window, operand 0, single buffered']
    #allocation3 [shape = 's32[1]{0}', space=sflag, size = 0x4, scoped, tag = 'scoped memory for tpu_custom_call.1']
    #allocation4 [shape = 's32[1]{0}', space=sflag, size = 0x4, scoped, tag = 'scoped memory for tpu_custom_call.1']
    #allocation5 [shape = 's32[1]{0}', space=sflag, size = 0x4, scoped, tag = 'scoped memory for tpu_custom_call.1']
    #allocation6 [shape = 'u8[8192]{0}', space=vmem, size = 0x2000, scoped, tag = 'input window, operand 1, single buffered']
    #allocation7 [shape = 'u8[4096]{0}', space=vmem, size = 0x1000, scoped, tag = 'output window, operand 0, single buffered']
    %7 = vsyncpa [#allocation5], 0
    %8 = vsyncpa [#allocation3], 0
    %9 = vsyncpa [#allocation4], 0
    // Predicated region
    $region2: #{tpu_custom_call.1} parent=1 // pred_check
      _
    $region3: #{tpu_custom_call.1} parent=1 // pred_check_branch
      %11 = sbr.rel (0) target = $region5
    $region4: #{tpu_custom_call.1} parent=1 // pred_region
      %s13 = ssub.s32 16, 16
      %14 = vsyncadd [#allocation5], %s13
      %17 = dma.hbm_to_smem %s0, 16, [#allocation2], [#allocation5]
    $region5: #{tpu_custom_call.1} parent=1 // pred_fallthru
      _
    // Predicated region
    $region6: #{tpu_custom_call.1} parent=1 // pred_check
      _
    $region7: #{tpu_custom_call.1} parent=1 // pred_check_branch
      %19 = sbr.rel (0) target = $region9
    $region8: #{tpu_custom_call.1} parent=1 // pred_region
      %s21 = ssub.s32 256, 256
      %22 = vsyncadd [#allocation3], %s21
      %s24 = sshll.u32 [#allocation6], 4
      %s25 = int_to_ptr.vmem [resolvable:$true] %s24
      %27 = dma.hbm_to_vmem [thread:$0]  %s1, 256, %s25, [#allocation3]
    $region9: #{tpu_custom_call.1} parent=1 // pred_fallthru
      _
    // Predicated region
    $region10: #{tpu_custom_call.1} parent=1 // pred_check
      _
    $region11: #{tpu_custom_call.1} parent=1 // pred_check_branch
      %29 = sbr.rel (0) target = $region13
    $region12: #{tpu_custom_call.1} parent=1 // pred_region
      %30 = dma.done [#allocation5], 16
    $region13: #{tpu_custom_call.1} parent=1 // pred_fallthru
      _
    // Predicated region
    $region14: #{tpu_custom_call.1} parent=1 // pred_check
      _
    $region15: #{tpu_custom_call.1} parent=1 // pred_check_branch
      %32 = sbr.rel (0) target = $region17
    $region16: #{tpu_custom_call.1} parent=1 // pred_region
      %33 = dma.done [#allocation3], 256
    $region17: #{tpu_custom_call.1} parent=1 // pred_fallthru
      _
    %34 = sfence
    %s35 = sld [smem:[#allocation2]]
    %s36 = sld [smem:[#allocation2 + $0x1]]
    %s37 = sld [smem:[#allocation2 + $0x2]]
    %v38 = vlaneseq
    %v39 = vshrl.u32 %v38, 7
    %v40 = vadd.s32 %v39, 8
    %v41 = vadd.s32 %v39, 16
    %v42 = vadd.s32 %v39, 24
    %v43 = vadd.s32 %v39, 32
    %v44 = vadd.s32 %v39, 40
    %v45 = vadd.s32 %v39, 48
    %v46 = vadd.s32 %v39, 56
    %v47 = vadd.s32 %v39, 64
    %v48 = vadd.s32 %v39, 72
    %v49 = vadd.s32 %v39, 80
    %v50 = vadd.s32 %v39, 88
    %v51 = vadd.s32 %v39, 96
    %v52 = vadd.s32 %v39, 104
    %v53 = vadd.s32 %v39, 112
    %v54 = vadd.s32 %v39, 120
    %v55 = vadd.s32 %v39, 128
    %v56 = vadd.s32 %v39, 136
    %v57 = vadd.s32 %v39, 144
    %v58 = vadd.s32 %v39, 152
    %v59 = vadd.s32 %v39, 160
    %v60 = vadd.s32 %v39, 168
    %v61 = vadd.s32 %v39, 176
    %v62 = vadd.s32 %v39, 184
    %v63 = vadd.s32 %v39, 192
    %v64 = vadd.s32 %v39, 200
    %v65 = vadd.s32 %v39, 208
    %v66 = vadd.s32 %v39, 216
    %v67 = vadd.s32 %v39, 224
    %v68 = vadd.s32 %v39, 232
    %v69 = vadd.s32 %v39, 240
    %v70 = vadd.s32 %v39, 248
    %v71 = vlaneseq
    %v72 = vand.u32 %v71, 127
    %v73 = vmul.u32 %v72, 2
    %vm74 = vcmp.eq.s32.totalorder %v39, %v73
    %vm75 = vcmp.eq.s32.totalorder %v40, %v73
    %vm76 = vcmp.eq.s32.totalorder %v41, %v73
    %vm77 = vcmp.eq.s32.totalorder %v42, %v73
    %vm78 = vcmp.eq.s32.totalorder %v43, %v73
    %vm79 = vcmp.eq.s32.totalorder %v44, %v73
    %vm80 = vcmp.eq.s32.totalorder %v45, %v73
    %vm81 = vcmp.eq.s32.totalorder %v46, %v73
    %vm82 = vcmp.eq.s32.totalorder %v47, %v73
    %vm83 = vcmp.eq.s32.totalorder %v48, %v73
    %vm84 = vcmp.eq.s32.totalorder %v49, %v73
    %vm85 = vcmp.eq.s32.totalorder %v50, %v73
    %vm86 = vcmp.eq.s32.totalorder %v51, %v73
    %vm87 = vcmp.eq.s32.totalorder %v52, %v73
    %vm88 = vcmp.eq.s32.totalorder %v53, %v73
    %vm89 = vcmp.eq.s32.totalorder %v54, %v73
    %vm90 = vcmp.eq.s32.totalorder %v55, %v73
    %vm91 = vcmp.eq.s32.totalorder %v56, %v73
    %vm92 = vcmp.eq.s32.totalorder %v57, %v73
    %vm93 = vcmp.eq.s32.totalorder %v58, %v73
    %vm94 = vcmp.eq.s32.totalorder %v59, %v73
    %vm95 = vcmp.eq.s32.totalorder %v60, %v73
    %vm96 = vcmp.eq.s32.totalorder %v61, %v73
    %vm97 = vcmp.eq.s32.totalorder %v62, %v73
    %vm98 = vcmp.eq.s32.totalorder %v63, %v73
    %vm99 = vcmp.eq.s32.totalorder %v64, %v73
    %vm100 = vcmp.eq.s32.totalorder %v65, %v73
    %vm101 = vcmp.eq.s32.totalorder %v66, %v73
    %vm102 = vcmp.eq.s32.totalorder %v67, %v73
    %vm103 = vcmp.eq.s32.totalorder %v68, %v73
    %vm104 = vcmp.eq.s32.totalorder %v69, %v73
    %vm105 = vcmp.eq.s32.totalorder %v70, %v73
    %v106 = vadd.s32 %v73, 1
    %vm107 = vcmp.eq.s32.totalorder %v39, %v106
    %vm108 = vcmp.eq.s32.totalorder %v40, %v106
    %vm109 = vcmp.eq.s32.totalorder %v41, %v106
    %vm110 = vcmp.eq.s32.totalorder %v42, %v106
    %vm111 = vcmp.eq.s32.totalorder %v43, %v106
    %vm112 = vcmp.eq.s32.totalorder %v44, %v106
    %vm113 = vcmp.eq.s32.totalorder %v45, %v106
    %vm114 = vcmp.eq.s32.totalorder %v46, %v106
    %vm115 = vcmp.eq.s32.totalorder %v47, %v106
    %vm116 = vcmp.eq.s32.totalorder %v48, %v106
    %vm117 = vcmp.eq.s32.totalorder %v49, %v106
    %vm118 = vcmp.eq.s32.totalorder %v50, %v106
    %vm119 = vcmp.eq.s32.totalorder %v51, %v106
    %vm120 = vcmp.eq.s32.totalorder %v52, %v106
    %vm121 = vcmp.eq.s32.totalorder %v53, %v106
    %vm122 = vcmp.eq.s32.totalorder %v54, %v106
    %vm123 = vcmp.eq.s32.totalorder %v55, %v106
    %vm124 = vcmp.eq.s32.totalorder %v56, %v106
    %vm125 = vcmp.eq.s32.totalorder %v57, %v106
    %vm126 = vcmp.eq.s32.totalorder %v58, %v106
    %vm127 = vcmp.eq.s32.totalorder %v59, %v106
    %vm128 = vcmp.eq.s32.totalorder %v60, %v106
    %vm129 = vcmp.eq.s32.totalorder %v61, %v106
    %vm130 = vcmp.eq.s32.totalorder %v62, %v106
    %vm131 = vcmp.eq.s32.totalorder %v63, %v106
    %vm132 = vcmp.eq.s32.totalorder %v64, %v106
    %vm133 = vcmp.eq.s32.totalorder %v65, %v106
    %vm134 = vcmp.eq.s32.totalorder %v66, %v106
    %vm135 = vcmp.eq.s32.totalorder %v67, %v106
    %vm136 = vcmp.eq.s32.totalorder %v68, %v106
    %vm137 = vcmp.eq.s32.totalorder %v69, %v106
    %vm138 = vcmp.eq.s32.totalorder %v70, %v106
    %v139 = vstv %s36
    %v140 = vsel %vm107, %v139, 0.0
    %v141 = vsel %vm108, %v139, 0.0
    %v142 = vsel %vm109, %v139, 0.0
    %v143 = vsel %vm110, %v139, 0.0
    %v144 = vsel %vm111, %v139, 0.0
    %v145 = vsel %vm112, %v139, 0.0
    %v146 = vsel %vm113, %v139, 0.0
    %v147 = vsel %vm114, %v139, 0.0
    %v148 = vsel %vm115, %v139, 0.0
    %v149 = vsel %vm116, %v139, 0.0
    %v150 = vsel %vm117, %v139, 0.0
    %v151 = vsel %vm118, %v139, 0.0
    %v152 = vsel %vm119, %v139, 0.0
    %v153 = vsel %vm120, %v139, 0.0
    %v154 = vsel %vm121, %v139, 0.0
    %v155 = vsel %vm122, %v139, 0.0
    %v156 = vsel %vm123, %v139, 0.0
    %v157 = vsel %vm124, %v139, 0.0
    %v158 = vsel %vm125, %v139, 0.0
    %v159 = vsel %vm126, %v139, 0.0
    %v160 = vsel %vm127, %v139, 0.0
    %v161 = vsel %vm128, %v139, 0.0
    %v162 = vsel %vm129, %v139, 0.0
    %v163 = vsel %vm130, %v139, 0.0
    %v164 = vsel %vm131, %v139, 0.0
    %v165 = vsel %vm132, %v139, 0.0
    %v166 = vsel %vm133, %v139, 0.0
    %v167 = vsel %vm134, %v139, 0.0
    %v168 = vsel %vm135, %v139, 0.0
    %v169 = vsel %vm136, %v139, 0.0
    %v170 = vsel %vm137, %v139, 0.0
    %v171 = vsel %vm138, %v139, 0.0
    %v172 = vstv %s35
    %v173 = vsel %vm74, %v172, %v140
    %v174 = vsel %vm75, %v172, %v141
    %v175 = vsel %vm76, %v172, %v142
    %v176 = vsel %vm77, %v172, %v143
    %v177 = vsel %vm78, %v172, %v144
    %v178 = vsel %vm79, %v172, %v145
    %v179 = vsel %vm80, %v172, %v146
    %v180 = vsel %vm81, %v172, %v147
    %v181 = vsel %vm82, %v172, %v148
    %v182 = vsel %vm83, %v172, %v149
    %v183 = vsel %vm84, %v172, %v150
    %v184 = vsel %vm85, %v172, %v151
    %v185 = vsel %vm86, %v172, %v152
    %v186 = vsel %vm87, %v172, %v153
    %v187 = vsel %vm88, %v172, %v154
    %v188 = vsel %vm89, %v172, %v155
    %v189 = vsel %vm90, %v172, %v156
    %v190 = vsel %vm91, %v172, %v157
    %v191 = vsel %vm92, %v172, %v158
    %v192 = vsel %vm93, %v172, %v159
    %v193 = vsel %vm94, %v172, %v160
    %v194 = vsel %vm95, %v172, %v161
    %v195 = vsel %vm96, %v172, %v162
    %v196 = vsel %vm97, %v172, %v163
    %v197 = vsel %vm98, %v172, %v164
    %v198 = vsel %vm99, %v172, %v165
    %v199 = vsel %vm100, %v172, %v166
    %v200 = vsel %vm101, %v172, %v167
    %v201 = vsel %vm102, %v172, %v168
    %v202 = vsel %vm103, %v172, %v169
    %v203 = vsel %vm104, %v172, %v170
    %v204 = vsel %vm105, %v172, %v171
    %v205 = vld [vmem:[#allocation6] sm:$0xff]
    %v206 = vld [vmem:[#allocation6 + $0x8] sm:$0xff]
    %v207 = vstv %s37
    %208 = vmatprep.subr.mxu0 0.0
    %209 = vmatpush1.msra.mxu0 %v188
    %210 = vmatprep.subr.mxu0 0.0
    %211 = vmatpush1.msra.mxu0 %v187
    %212 = vmatprep.subr.mxu0 0.0
    %213 = vmatpush1.msra.mxu0 %v186
    %214 = vmatprep.subr.mxu0 0.0
    %215 = vmatpush1.msra.mxu0 %v185
    %216 = vmatprep.subr.mxu0 0.0
    %217 = vmatpush1.msra.mxu0 %v184
    %218 = vmatprep.subr.mxu0 0.0
    %219 = vmatpush1.msra.mxu0 %v183
    %220 = vmatprep.subr.mxu0 0.0
    %221 = vmatpush1.msra.mxu0 %v182
    %222 = vmatprep.subr.mxu0 0.0
    %223 = vmatpush1.msra.mxu0 %v181
    %224 = vmatprep.subr.mxu0 0.0
    %225 = vmatpush1.msra.mxu0 %v180
    %226 = vmatprep.subr.mxu0 0.0
    %227 = vmatpush1.msra.mxu0 %v179
    %228 = vmatprep.subr.mxu0 0.0
    %229 = vmatpush1.msra.mxu0 %v178
    %230 = vmatprep.subr.mxu0 0.0
    %231 = vmatpush1.msra.mxu0 %v177
    %232 = vmatprep.subr.mxu0 0.0
    %233 = vmatpush1.msra.mxu0 %v176
    %234 = vmatprep.subr.mxu0 0.0
    %235 = vmatpush1.msra.mxu0 %v175
    %236 = vmatprep.subr.mxu0 0.0
    %237 = vmatpush1.msra.mxu0 %v174
    %238 = vmatprep.subr.mxu0 0.0
    %239 = vmatpush1.msra.mxu0 %v173
    %240 = vmatprep.subr.mxu0 0.0
    %241 = vmatpush2.msra.mxu0 %v204
    %242 = vmatprep.subr.mxu0 0.0
    %243 = vmatpush2.msra.mxu0 %v203
    %244 = vmatprep.subr.mxu0 0.0
    %245 = vmatpush2.msra.mxu0 %v202
    %246 = vmatprep.subr.mxu0 0.0
    %247 = vmatpush2.msra.mxu0 %v201
    %248 = vmatprep.subr.mxu0 0.0
    %249 = vmatpush2.msra.mxu0 %v200
    %250 = vmatprep.subr.mxu0 0.0
    %251 = vmatpush2.msra.mxu0 %v199
    %252 = vmatprep.subr.mxu0 0.0
    %253 = vmatpush2.msra.mxu0 %v198
    %254 = vmatprep.subr.mxu0 0.0
    %255 = vmatpush2.msra.mxu0 %v197
    %256 = vmatprep.subr.mxu0 0.0
    %257 = vmatpush2.msra.mxu0 %v196
    %258 = vmatprep.subr.mxu0 0.0
    %259 = vmatpush2.msra.mxu0 %v195
    %260 = vmatprep.subr.mxu0 0.0
    %261 = vmatpush2.msra.mxu0 %v194
    %262 = vmatprep.subr.mxu0 0.0
    %263 = vmatpush2.msra.mxu0 %v193
    %264 = vmatprep.subr.mxu0 0.0
    %265 = vmatpush2.msra.mxu0 %v192
    %266 = vmatprep.subr.mxu0 0.0
    %267 = vmatpush2.msra.mxu0 %v191
    %268 = vmatprep.subr.mxu0 0.0
    %269 = vmatpush2.msra.mxu0 %v190
    %270 = vmatprep.subr.mxu0 0.0
    %271 = vmatpush2.msra.mxu0 %v189
    %272 = vmatprep.mubr.f32.mxu0 %v206
    %273 = vmatmul.mubr.f32.gmra.mxu0 %v205
    %v274 = vpop.f32.mrf.mxu0
    %v275 = vadd.f32 %v207, %v274
    %v276 = vpop.f32.mrf.mxu0
    %277 = vdwg.mxu0
    %278 = vst [vmem:[#allocation7] sm:$0xff] %v275
    // Predicated region
    $region18: #{tpu_custom_call.1} parent=1 // pred_check
      _
    $region19: #{tpu_custom_call.1} parent=1 // pred_check_branch
      %280 = sbr.rel (0) target = $region21
    $region20: #{tpu_custom_call.1} parent=1 // pred_region
      %s282 = ssub.s32 128, 128
      %283 = vsyncadd [#allocation4], %s282
      %s285 = sshll.u32 [#allocation7], 4
      %s286 = int_to_ptr.vmem [resolvable:$true] %s285
      %288 = dma.vmem_to_hbm [thread:$0]  %s286, 128, %s2, [#allocation4]
    $region21: #{tpu_custom_call.1} parent=1 // pred_fallthru
      _
    // Predicated region
    $region22: #{tpu_custom_call.1} parent=1 // pred_check
      _
    $region23: #{tpu_custom_call.1} parent=1 // pred_check_branch
      %290 = sbr.rel (0) target = $region25
    $region24: #{tpu_custom_call.1} parent=1 // pred_region
      %291 = dma.done [#allocation4], 128
    $region25: #{tpu_custom_call.1} parent=1 // pred_fallthru
      _
    %292 = vsyncpa [#allocation3], 1
    %293 = vsyncpa [#allocation4], 1
    %294 = vsyncpa [#allocation5], 1

</llo_original>
